<compile_context>
chip_gen: v7x
topology: tpu7x:2x2x1
jax: 0.10.0
libtpu: 0.0.40
codegen_flags: <defaults>
</compile_context>

<pallas_src>
import functools
import math

import jax
import jax.numpy as jnp
from jax.experimental import pallas as pl
from jax.experimental.pallas import tpu as pltpu

S_SCALE = 64.0                 # CombinedMarginLoss s
M2 = 0.5                       # CombinedMarginLoss m2 (ArcFace additive angular margin)
_LOG_EPS = math.log(1e-30)     # DistCrossEntropy clamp_min(1e-30).log()


def _partial_fc_kernel(lab_ref, emb_ref, wt_ref, out_ref,
                       m_acc, l_acc, t_acc, xn_buf,
                       *, s, cos_m, sin_m, tb, tc, b_real, b_pad, c_real, c_pad):
    bi = pl.program_id(0)
    ci = pl.program_id(1)
    n_c = pl.num_programs(1)

    labels = lab_ref[...]                                   # (TB, 1) int32, -1 == ignore

    # ---- per-batch-tile init: accumulators + cached normalized embeddings ----
    @pl.when(ci == 0)
    def _init():
        m_acc[...] = jnp.full((tb, 1), -1e30, jnp.float32)
        l_acc[...] = jnp.zeros((tb, 1), jnp.float32)
        t_acc[...] = jnp.zeros((tb, 1), jnp.float32)
        x = emb_ref[...].astype(jnp.float32)                # (TB, E) f32
        inv = jax.lax.rsqrt(
            jnp.maximum(jnp.sum(x * x, axis=-1, keepdims=True), 1e-24))
        xn_buf[...] = (x * inv).astype(jnp.bfloat16)        # bf16 for the MXU

    # ---- streamed (E, TC) bf16 weight tile: lane-dense MXU matmul, f32 accum ----
    w = wt_ref[...]                                                     # (E, TC) bf16
    raw = jnp.dot(xn_buf[...], w, preferred_element_type=jnp.float32)   # (TB, TC) f32
    w32 = w.astype(jnp.float32)
    w_inv = jax.lax.rsqrt(
        jnp.maximum(jnp.sum(w32 * w32, axis=0, keepdims=True), 1e-24))  # (1, TC)
    cos = jnp.clip(raw * w_inv, -1.0, 1.0)                              # (TB, TC)

    # ---- ArcFace margin for the target logit only (per-row (TB,1) math) ----
    col0 = ci * tc
    col = col0 + jax.lax.broadcasted_iota(jnp.int32, (1, tc), 1)        # (1, TC)
    onehot = col == labels                                              # (TB, TC)
    in_tile = (labels >= col0) & (labels < col0 + tc)                   # (TB, 1)

    cos_t = jnp.sum(jnp.where(onehot, cos, 0.0), axis=-1, keepdims=True)   # (TB, 1)
    sin_t = jnp.sqrt(jnp.maximum(1.0 - cos_t * cos_t, 0.0))
    margin_t = cos_t * cos_m - sin_t * sin_m                                # (TB, 1)

    logits = jnp.where(onehot, margin_t, cos) * s                       # (TB, TC)
    if c_pad != c_real:                                                 # mask padded classes
        logits = jnp.where(col < c_real, logits, -1e30)

    # ---- online softmax over the streamed class axis ----
    m_prev = m_acc[...]
    m_new = jnp.maximum(m_prev, jnp.max(logits, axis=-1, keepdims=True))
    p = jnp.exp(logits - m_new)
    l_acc[...] = jnp.exp(m_prev - m_new) * l_acc[...] + jnp.sum(p, axis=-1, keepdims=True)
    t_acc[...] = t_acc[...] + jnp.where(in_tile, margin_t * s, 0.0)
    m_acc[...] = m_new

    # ---- finalize: -log(softmax prob of target), clamped like torch ----
    @pl.when(ci == n_c - 1)
    def _finalize():
        log_denom = m_acc[...] + jnp.log(l_acc[...])                    # (TB, 1)
        valid = labels >= 0
        log_p = jnp.where(valid, t_acc[...] - log_denom, _LOG_EPS)
        log_p = jnp.maximum(log_p, _LOG_EPS)      # == clamp_min(1e-30).log()
        loss_row = -log_p                                               # (TB, 1)
        if b_pad != b_real:                                             # mask padded rows
            row = bi * tb + jax.lax.broadcasted_iota(jnp.int32, (tb, 1), 0)
            loss_row = jnp.where(row < b_real, loss_row, 0.0)
        total = jnp.sum(loss_row, axis=0, keepdims=True)                # (1, 1)
        out_ref[...] = jnp.broadcast_to(total.reshape(1, 1, 1), (1, 1, 128))


def _round_up(x, m):
    return (x + m - 1) // m * m


def partial_fc_v2_forward(local_embeddings, local_labels, weight, *, tb=128, tc=512):
    """Single-rank PartialFC_V2 forward. Returns a scalar f32 loss.

    tb: batch tile (VMEM-resident rows, multiple of 8; 'parallel' grid axis).
    tc: class tile (streamed, multiple of 128; >=512 recommended, halve on v7x).
    """
    B, E = local_embeddings.shape
    C, E_w = weight.shape
    assert E == E_w

    # Label preprocessing (squeeze / long / range masking) in plain JAX.
    labels = local_labels.reshape(-1).astype(jnp.int32)
    labels = jnp.where((labels >= 0) & (labels < C), labels, -1)

    # Tile sizes & padding (lanes -> multiples of 128, sublanes -> multiples of 8).
    TB = _round_up(min(tb, _round_up(B, 8)), 8)
    TC = _round_up(min(tc, _round_up(C, 128)), 128)
    B_pad = _round_up(B, TB)
    C_pad = _round_up(C, TC)
    E_pad = _round_up(E, 128)
    n_b, n_c = B_pad // TB, C_pad // TC

    emb = jnp.pad(local_embeddings.astype(jnp.float32),
                  ((0, B_pad - B), (0, E_pad - E)))
    lab = jnp.pad(labels, (0, B_pad - B), constant_values=-1).reshape(B_pad, 1)
    # One-time layout change: (C, E) f32 -> (E, C) bf16 (halves HBM weight streaming).
    w_t = jnp.transpose(
        jnp.pad(weight.astype(jnp.float32),
                ((0, C_pad - C), (0, E_pad - E))).astype(jnp.bfloat16))

    kernel = functools.partial(
        _partial_fc_kernel, s=S_SCALE, cos_m=math.cos(M2), sin_m=math.sin(M2),
        tb=TB, tc=TC, b_real=B, b_pad=B_pad, c_real=C, c_pad=C_pad)

    partial_sums = pl.pallas_call(
        kernel,
        out_shape=jax.ShapeDtypeStruct((n_b, 1, 128), jnp.float32),
        grid_spec=pltpu.PrefetchScalarGridSpec(
            num_scalar_prefetch=0,
            grid=(n_b, n_c),
            in_specs=[
                pl.BlockSpec((TB, 1), lambda bi, ci: (bi, 0)),       # labels
                pl.BlockSpec((TB, E_pad), lambda bi, ci: (bi, 0)),   # embeddings (resident per bi)
                pl.BlockSpec((E_pad, TC), lambda bi, ci: (0, ci)),   # weight tiles (streamed)
            ],
            out_specs=pl.BlockSpec((1, 1, 128), lambda bi, ci: (bi, 0, 0)),
            scratch_shapes=[
                pltpu.VMEM((TB, 1), jnp.float32),        # running max  m
                pltpu.VMEM((TB, 1), jnp.float32),        # running sum  l
                pltpu.VMEM((TB, 1), jnp.float32),        # target logit s*cos(theta+m)
                pltpu.VMEM((TB, E_pad), jnp.bfloat16),   # cached normalized embeddings
            ],
        ),
        compiler_params=pltpu.CompilerParams(
            dimension_semantics=("parallel", "arbitrary"),   # batch across cores, C streamed
            vmem_limit_bytes=32 * 1024 * 1024,               # raise/sweep for very large tiles
        ),
    )(lab, emb, w_t)

    return jnp.sum(partial_sums[:, 0, 0]) / B


def _reference_loss(emb, labels, weight, *, s=S_SCALE, m2=M2):
    """Pure-JAX f32 reference mirroring the PyTorch module (world_size=1)."""
    C = weight.shape[0]
    lab = labels.reshape(-1).astype(jnp.int32)
    lab = jnp.where((lab >= 0) & (lab < C), lab, -1)
    xn = emb / jnp.maximum(jnp.linalg.norm(emb, axis=1, keepdims=True), 1e-12)
    wn = weight / jnp.maximum(jnp.linalg.norm(weight, axis=1, keepdims=True), 1e-12)
    logits = jnp.clip(xn @ wn.T, -1.0, 1.0)
    onehot = lab[:, None] == jnp.arange(C)[None, :]
    margin = logits * math.cos(m2) - jnp.sqrt(jnp.maximum(1.0 - logits * logits, 0.0)) * math.sin(m2)
    logits = jnp.where(onehot, margin, logits) * s
    p = jax.nn.softmax(logits, axis=1)
    tgt = jnp.sum(jnp.where(onehot, p, 0.0), axis=1)
    return jnp.mean(-jnp.log(jnp.maximum(tgt, 1e-30)))


if __name__ == "__main__":
    # Small, deliberately unaligned shapes (exercise B/E/C padding + multi-tile grid).
    B, E, C = 12, 96, 300

    key = jax.random.PRNGKey(0)
    k_emb, k_lab, k_w = jax.random.split(key, 3)
    local_embeddings = jax.random.normal(k_emb, (B, E), dtype=jnp.float32)
    local_labels = jax.random.randint(k_lab, (B,), 0, C, dtype=jnp.int32)
    local_labels = local_labels.at[0].set(C + 7)   # out-of-range -> label -1 path
    weight = 0.01 * jax.random.normal(k_w, (C, E), dtype=jnp.float32)

    loss = partial_fc_v2_forward(local_embeddings, local_labels, weight, tb=8, tc=128)
    loss = jax.block_until_ready(loss)
    assert loss.shape == () and bool(jnp.isfinite(loss))

    ref = _reference_loss(local_embeddings, local_labels, weight)
    assert jnp.allclose(loss, ref, rtol=5e-2, atol=1e-1), (float(loss), float(ref))

    print("KERNEL_OK")
</pallas_src>

<mosaic_0001>
module attributes {stable_mosaic.version = 11 : i64} {
  func.func @_partial_fc_kernel(%arg0: i32, %arg1: i32, %arg2: memref<8x1xi32, #tpu.memory_space<vmem>>, %arg3: memref<8x128xf32, #tpu.memory_space<vmem>>, %arg4: memref<128x128xbf16, #tpu.memory_space<vmem>>, %arg5: memref<1x1x128xf32, #tpu.memory_space<vmem>>, %arg6: memref<8x1xf32, #tpu.memory_space<vmem>>, %arg7: memref<8x1xf32, #tpu.memory_space<vmem>>, %arg8: memref<8x1xf32, #tpu.memory_space<vmem>>, %arg9: memref<8x128xbf16, #tpu.memory_space<vmem>>) attributes {dimension_semantics = [#tpu.dimension_semantics<parallel>, #tpu.dimension_semantics<arbitrary>], iteration_bounds = array<i64: 2, 3>, scalar_prefetch = 0 : i64, scratch_operands = 4 : i64, tpu.core_type = #tpu.core_type<tc>, window_params = [{transform_indices = @transform_0, window_bounds = array<i64: 8, 1>}, {transform_indices = @transform_1, window_bounds = array<i64: 8, 128>}, {transform_indices = @transform_2, window_bounds = array<i64: 128, 128>}, {transform_indices = @transform_3, window_bounds = array<i64: 1, 1, 128>}]} {
    %c0 = arith.constant 0 : index
    %c0_0 = arith.constant 0 : index
    %0 = vector.load %arg2[%c0, %c0_0] : memref<8x1xi32, #tpu.memory_space<vmem>>, vector<8x1xi32>
    %c0_i32 = arith.constant 0 : i32
    %1 = arith.cmpi eq, %arg1, %c0_i32 : i32
    %2 = arith.extui %1 : i1 to i32
    %c0_i32_1 = arith.constant 0 : i32
    %3 = arith.cmpi ne, %2, %c0_i32_1 : i32
    scf.if %3 {
      %cst_36 = arith.constant -1.000000e+30 : f32
      %85 = vector.broadcast %cst_36 : f32 to vector<8x1xf32>
      %c0_37 = arith.constant 0 : index
      %c0_38 = arith.constant 0 : index
      %86 = vector.load %arg6[%c0_37, %c0_38] : memref<8x1xf32, #tpu.memory_space<vmem>>, vector<8x1xf32>
      tpu.vector_store %arg6[%c0_37, %c0_38], %85 {strides = array<i32>} : memref<8x1xf32, #tpu.memory_space<vmem>>, vector<8x1xf32>,
      %cst_39 = arith.constant 0.000000e+00 : f32
      %87 = vector.broadcast %cst_39 : f32 to vector<8x1xf32>
      %c0_40 = arith.constant 0 : index
      %c0_41 = arith.constant 0 : index
      %88 = vector.load %arg7[%c0_40, %c0_41] : memref<8x1xf32, #tpu.memory_space<vmem>>, vector<8x1xf32>
      tpu.vector_store %arg7[%c0_40, %c0_41], %87 {strides = array<i32>} : memref<8x1xf32, #tpu.memory_space<vmem>>, vector<8x1xf32>,
      %cst_42 = arith.constant 0.000000e+00 : f32
      %89 = vector.broadcast %cst_42 : f32 to vector<8x1xf32>
      %c0_43 = arith.constant 0 : index
      %c0_44 = arith.constant 0 : index
      %90 = vector.load %arg8[%c0_43, %c0_44] : memref<8x1xf32, #tpu.memory_space<vmem>>, vector<8x1xf32>
      tpu.vector_store %arg8[%c0_43, %c0_44], %89 {strides = array<i32>} : memref<8x1xf32, #tpu.memory_space<vmem>>, vector<8x1xf32>,
      %c0_45 = arith.constant 0 : index
      %c0_46 = arith.constant 0 : index
      %91 = vector.load %arg3[%c0_45, %c0_46] : memref<8x128xf32, #tpu.memory_space<vmem>>, vector<8x128xf32>
      %92 = arith.mulf %91, %91 : vector<8x128xf32>
      %cst_47 = arith.constant dense<0.000000e+00> : vector<8xf32>
      %93 = vector.multi_reduction <add>, %92, %cst_47 [1] : vector<8x128xf32> to vector<8xf32>
      %94 = vector.shape_cast %93 : vector<8xf32> to vector<8x1xf32>
      %cst_48 = arith.constant 1.000000e-24 : f32
      %95 = vector.broadcast %cst_48 : f32 to vector<8x1xf32>
      %96 = arith.maximumf %94, %95 : vector<8x1xf32>
      %97 = math.rsqrt %96 : vector<8x1xf32>
      %98 = vector.broadcast %97 : vector<8x1xf32> to vector<8x128xf32>
      %99 = arith.mulf %91, %98 : vector<8x128xf32>
      %100 = arith.truncf %99 : vector<8x128xf32> to vector<8x128xbf16>
      %c0_49 = arith.constant 0 : index
      %c0_50 = arith.constant 0 : index
      %101 = vector.load %arg9[%c0_49, %c0_50] : memref<8x128xbf16, #tpu.memory_space<vmem>>, vector<8x128xbf16>
      tpu.vector_store %arg9[%c0_49, %c0_50], %100 {strides = array<i32>} : memref<8x128xbf16, #tpu.memory_space<vmem>>, vector<8x128xbf16>,
    } else {
    }
    %c0_2 = arith.constant 0 : index
    %c0_3 = arith.constant 0 : index
    %4 = vector.load %arg4[%c0_2, %c0_3] : memref<128x128xbf16, #tpu.memory_space<vmem>>, vector<128x128xbf16>
    %c0_4 = arith.constant 0 : index
    %c0_5 = arith.constant 0 : index
    %5 = vector.load %arg9[%c0_4, %c0_5] : memref<8x128xbf16, #tpu.memory_space<vmem>>, vector<8x128xbf16>
    %cst = arith.constant dense<0.000000e+00> : vector<8x128xf32>
    %6 = tpu.matmul %5, %4, %cst {dimension_numbers = #tpu.dot_dimension_numbers<[1], [0], [0], [1], [0, 0, 1, 1], [], []>} : vector<8x128xbf16>, vector<128x128xbf16>, vector<8x128xf32> -> vector<8x128xf32>
    %7 = arith.extf %4 : vector<128x128xbf16> to vector<128x128xf32>
    %8 = arith.mulf %7, %7 : vector<128x128xf32>
    %cst_6 = arith.constant dense<0.000000e+00> : vector<128xf32>
    %9 = vector.multi_reduction <add>, %8, %cst_6 [0] : vector<128x128xf32> to vector<128xf32>
    %10 = vector.shape_cast %9 : vector<128xf32> to vector<1x128xf32>
    %cst_7 = arith.constant 1.000000e-24 : f32
    %11 = vector.broadcast %cst_7 : f32 to vector<1x128xf32>
    %12 = arith.maximumf %10, %11 : vector<1x128xf32>
    %13 = math.rsqrt %12 : vector<1x128xf32>
    %14 = vector.broadcast %13 : vector<1x128xf32> to vector<8x128xf32>
    %15 = arith.mulf %6, %14 : vector<8x128xf32>
    %cst_8 = arith.constant -1.000000e+00 : f32
    %cst_9 = arith.constant 1.000000e+00 : f32
    %16 = vector.broadcast %cst_8 : f32 to vector<8x128xf32>
    %17 = arith.maximumf %16, %15 : vector<8x128xf32>
    %18 = vector.broadcast %cst_9 : f32 to vector<8x128xf32>
    %19 = arith.minimumf %18, %17 : vector<8x128xf32>
    %c128_i32 = arith.constant 128 : i32
    %20 = arith.muli %arg1, %c128_i32 : i32
    %21 = tpu.iota {dimensions = array<i32: 1>} : vector<1x128xi32>
    %22 = vector.broadcast %20 : i32 to vector<1x128xi32>
    %23 = arith.addi %22, %21 : vector<1x128xi32>
    %24 = vector.broadcast %23 : vector<1x128xi32> to vector<8x128xi32>
    %25 = vector.broadcast %0 : vector<8x1xi32> to vector<8x128xi32>
    %26 = arith.cmpi eq, %24, %25 : vector<8x128xi32>
    %27 = vector.broadcast %20 : i32 to vector<8x1xi32>
    %28 = arith.cmpi sge, %0, %27 : vector<8x1xi32>
    %c128_i32_10 = arith.constant 128 : i32
    %29 = arith.addi %20, %c128_i32_10 : i32
    %30 = vector.broadcast %29 : i32 to vector<8x1xi32>
    %31 = arith.cmpi slt, %0, %30 : vector<8x1xi32>
    %32 = arith.andi %28, %31 : vector<8x1xi1>
    %cst_11 = arith.constant 0.000000e+00 : f32
    %33 = vector.broadcast %cst_11 : f32 to vector<8x128xf32>
    %34 = arith.select %26, %19, %33 : vector<8x128xi1>, vector<8x128xf32>
    %cst_12 = arith.constant dense<0.000000e+00> : vector<8xf32>
    %35 = vector.multi_reduction <add>, %34, %cst_12 [1] : vector<8x128xf32> to vector<8xf32>
    %36 = vector.shape_cast %35 : vector<8xf32> to vector<8x1xf32>
    %37 = arith.mulf %36, %36 : vector<8x1xf32>
    %cst_13 = arith.constant 1.000000e+00 : f32
    %38 = vector.broadcast %cst_13 : f32 to vector<8x1xf32>
    %39 = arith.subf %38, %37 : vector<8x1xf32>
    %cst_14 = arith.constant 0.000000e+00 : f32
    %40 = vector.broadcast %cst_14 : f32 to vector<8x1xf32>
    %41 = arith.maximumf %39, %40 : vector<8x1xf32>
    %42 = math.sqrt %41 : vector<8x1xf32>
    %cst_15 = arith.constant 0.87758255 : f32
    %43 = vector.broadcast %cst_15 : f32 to vector<8x1xf32>
    %44 = arith.mulf %36, %43 : vector<8x1xf32>
    %cst_16 = arith.constant 0.47942555 : f32
    %45 = vector.broadcast %cst_16 : f32 to vector<8x1xf32>
    %46 = arith.mulf %42, %45 : vector<8x1xf32>
    %47 = arith.subf %44, %46 : vector<8x1xf32>
    %48 = vector.shape_cast %47 : vector<8x1xf32> to vector<8x1xf32>
    %49 = vector.broadcast %48 : vector<8x1xf32> to vector<8x128xf32>
    %50 = arith.select %26, %49, %19 : vector<8x128xi1>, vector<8x128xf32>
    %cst_17 = arith.constant 6.400000e+01 : f32
    %51 = vector.broadcast %cst_17 : f32 to vector<8x128xf32>
    %52 = arith.mulf %50, %51 : vector<8x128xf32>
    %c300_i32 = arith.constant 300 : i32
    %53 = vector.broadcast %c300_i32 : i32 to vector<1x128xi32>
    %54 = arith.cmpi slt, %23, %53 : vector<1x128xi32>
    %cst_18 = arith.constant -1.000000e+30 : f32
    %55 = vector.shape_cast %54 : vector<1x128xi1> to vector<1x128xi1>
    %56 = vector.broadcast %55 : vector<1x128xi1> to vector<8x128xi1>
    %57 = vector.broadcast %cst_18 : f32 to vector<8x128xf32>
    %58 = arith.select %56, %52, %57 : vector<8x128xi1>, vector<8x128xf32>
    %c0_19 = arith.constant 0 : index
    %c0_20 = arith.constant 0 : index
    %59 = vector.load %arg6[%c0_19, %c0_20] : memref<8x1xf32, #tpu.memory_space<vmem>>, vector<8x1xf32>
    %cst_21 = arith.constant dense<0xFF800000> : vector<8xf32>
    %60 = vector.multi_reduction <maximumf>, %58, %cst_21 [1] : vector<8x128xf32> to vector<8xf32>
    %61 = vector.shape_cast %60 : vector<8xf32> to vector<8x1xf32>
    %62 = arith.maximumf %59, %61 : vector<8x1xf32>
    %63 = vector.broadcast %62 : vector<8x1xf32> to vector<8x128xf32>
    %64 = arith.subf %58, %63 : vector<8x128xf32>
    %65 = math.exp %64 : vector<8x128xf32>
    %66 = arith.subf %59, %62 : vector<8x1xf32>
    %67 = math.exp %66 : vector<8x1xf32>
    %c0_22 = arith.constant 0 : index
    %c0_23 = arith.constant 0 : index
    %68 = vector.load %arg7[%c0_22, %c0_23] : memref<8x1xf32, #tpu.memory_space<vmem>>, vector<8x1xf32>
    %69 = arith.mulf %67, %68 : vector<8x1xf32>
    %cst_24 = arith.constant dense<0.000000e+00> : vector<8xf32>
    %70 = vector.multi_reduction <add>, %65, %cst_24 [1] : vector<8x128xf32> to vector<8xf32>
    %71 = vector.shape_cast %70 : vector<8xf32> to vector<8x1xf32>
    %72 = arith.addf %69, %71 : vector<8x1xf32>
    %c0_25 = arith.constant 0 : index
    %c0_26 = arith.constant 0 : index
    %73 = vector.load %arg7[%c0_25, %c0_26] : memref<8x1xf32, #tpu.memory_space<vmem>>, vector<8x1xf32>
    tpu.vector_store %arg7[%c0_25, %c0_26], %72 {strides = array<i32>} : memref<8x1xf32, #tpu.memory_space<vmem>>, vector<8x1xf32>,
    %c0_27 = arith.constant 0 : index
    %c0_28 = arith.constant 0 : index
    %74 = vector.load %arg8[%c0_27, %c0_28] : memref<8x1xf32, #tpu.memory_space<vmem>>, vector<8x1xf32>
    %cst_29 = arith.constant 6.400000e+01 : f32
    %75 = vector.broadcast %cst_29 : f32 to vector<8x1xf32>
    %76 = arith.mulf %47, %75 : vector<8x1xf32>
    %cst_30 = arith.constant 0.000000e+00 : f32
    %77 = vector.broadcast %cst_30 : f32 to vector<8x1xf32>
    %78 = arith.select %32, %76, %77 : vector<8x1xi1>, vector<8x1xf32>
    %79 = arith.addf %74, %78 : vector<8x1xf32>
    %c0_31 = arith.constant 0 : index
    %c0_32 = arith.constant 0 : index
    %80 = vector.load %arg8[%c0_31, %c0_32] : memref<8x1xf32, #tpu.memory_space<vmem>>, vector<8x1xf32>
    tpu.vector_store %arg8[%c0_31, %c0_32], %79 {strides = array<i32>} : memref<8x1xf32, #tpu.memory_space<vmem>>, vector<8x1xf32>,
    %c0_33 = arith.constant 0 : index
    %c0_34 = arith.constant 0 : index
    %81 = vector.load %arg6[%c0_33, %c0_34] : memref<8x1xf32, #tpu.memory_space<vmem>>, vector<8x1xf32>
    tpu.vector_store %arg6[%c0_33, %c0_34], %62 {strides = array<i32>} : memref<8x1xf32, #tpu.memory_space<vmem>>, vector<8x1xf32>,
    %c2_i32 = arith.constant 2 : i32
    %82 = arith.cmpi eq, %arg1, %c2_i32 : i32
    %83 = arith.extui %82 : i1 to i32
    %c0_i32_35 = arith.constant 0 : i32
    %84 = arith.cmpi ne, %83, %c0_i32_35 : i32
    scf.if %84 {
      %c0_36 = arith.constant 0 : index
      %c0_37 = arith.constant 0 : index
      %85 = vector.load %arg6[%c0_36, %c0_37] : memref<8x1xf32, #tpu.memory_space<vmem>>, vector<8x1xf32>
      %c0_38 = arith.constant 0 : index
      %c0_39 = arith.constant 0 : index
      %86 = vector.load %arg7[%c0_38, %c0_39] : memref<8x1xf32, #tpu.memory_space<vmem>>, vector<8x1xf32>
      %87 = math.log %86 : vector<8x1xf32>
      %88 = arith.addf %85, %87 : vector<8x1xf32>
      %c0_i32_40 = arith.constant 0 : i32
      %89 = vector.broadcast %c0_i32_40 : i32 to vector<8x1xi32>
      %90 = arith.cmpi sge, %0, %89 : vector<8x1xi32>
      %c0_41 = arith.constant 0 : index
      %c0_42 = arith.constant 0 : index
      %91 = vector.load %arg8[%c0_41, %c0_42] : memref<8x1xf32, #tpu.memory_space<vmem>>, vector<8x1xf32>
      %92 = arith.subf %91, %88 : vector<8x1xf32>
      %cst_43 = arith.constant -69.0775528 : f32
      %93 = vector.broadcast %cst_43 : f32 to vector<8x1xf32>
      %94 = arith.select %90, %92, %93 : vector<8x1xi1>, vector<8x1xf32>
      %cst_44 = arith.constant -69.0775528 : f32
      %95 = vector.broadcast %cst_44 : f32 to vector<8x1xf32>
      %96 = arith.maximumf %94, %95 : vector<8x1xf32>
      %cst_45 = arith.constant 0.000000e+00 : f32
      %97 = vector.broadcast %cst_45 : f32 to vector<8x1xf32>
      %98 = arith.subf %97, %96 : vector<8x1xf32>
      %c8_i32 = arith.constant 8 : i32
      %99 = arith.muli %arg0, %c8_i32 : i32
      %100 = tpu.iota {dimensions = array<i32: 0>} : vector<8x1xi32>
      %101 = vector.broadcast %99 : i32 to vector<8x1xi32>
      %102 = arith.addi %101, %100 : vector<8x1xi32>
      %c12_i32 = arith.constant 12 : i32
      %103 = vector.broadcast %c12_i32 : i32 to vector<8x1xi32>
      %104 = arith.cmpi slt, %102, %103 : vector<8x1xi32>
      %cst_46 = arith.constant 0.000000e+00 : f32
      %105 = vector.broadcast %cst_46 : f32 to vector<8x1xf32>
      %106 = arith.select %104, %98, %105 : vector<8x1xi1>, vector<8x1xf32>
      %cst_47 = arith.constant dense<0.000000e+00> : vector<1xf32>
      %107 = vector.multi_reduction <add>, %106, %cst_47 [0] : vector<8x1xf32> to vector<1xf32>
      %108 = vector.shape_cast %107 : vector<1xf32> to vector<1x1xf32>
      %109 = vector.shape_cast %108 : vector<1x1xf32> to vector<1x1x1xf32>
      %110 = vector.shape_cast %109 : vector<1x1x1xf32> to vector<1x1x1xf32>
      %111 = vector.broadcast %110 : vector<1x1x1xf32> to vector<1x1x128xf32>
      %c0_48 = arith.constant 0 : index
      %c0_49 = arith.constant 0 : index
      %c0_50 = arith.constant 0 : index
      %112 = vector.load %arg5[%c0_48, %c0_49, %c0_50] : memref<1x1x128xf32, #tpu.memory_space<vmem>>, vector<1x1x128xf32>
      tpu.vector_store %arg5[%c0_48, %c0_49, %c0_50], %111 {strides = array<i32>} : memref<1x1x128xf32, #tpu.memory_space<vmem>>, vector<1x1x128xf32>,
    } else {
    }
    return
  }
  func.func @transform_0(%arg0: i32, %arg1: i32) -> (i32, i32) {
    %c0_i32 = arith.constant 0 : i32
    %c0_i32_0 = arith.constant 0 : i32
    return %arg0, %c0_i32 : i32, i32
  }
  func.func @transform_1(%arg0: i32, %arg1: i32) -> (i32, i32) {
    %c0_i32 = arith.constant 0 : i32
    %c0_i32_0 = arith.constant 0 : i32
    return %arg0, %c0_i32 : i32, i32
  }
  func.func @transform_2(%arg0: i32, %arg1: i32) -> (i32, i32) {
    %c0_i32 = arith.constant 0 : i32
    %c0_i32_0 = arith.constant 0 : i32
    return %c0_i32, %arg1 : i32, i32
  }
  func.func @transform_3(%arg0: i32, %arg1: i32) -> (i32, i32, i32) {
    %c0_i32 = arith.constant 0 : i32
    %c0_i32_0 = arith.constant 0 : i32
    %c0_i32_1 = arith.constant 0 : i32
    return %arg0, %c0_i32, %c0_i32_0 : i32, i32, i32
  }
}

</mosaic_0001>

<llo_original>
// kernel: tpu_custom_call.1
$region0: #{tpu_custom_call.1}
  #allocation0 [shape = 'u32[]', space=smem, size = 0x4, offset = 0x4, fixed_abs, tag = 'smem constant byte address 0x4 - core index']
  #allocation1 [shape = 'u32[144,128]{1,0:T(1,128)}', space=vmem, size = 0x12000, scoped, tag = 'internal scratch']
  #allocation2 [shape = 'f32[8,1]{1,0:T(8,128)}', space=vmem, size = 0x1000, scoped, tag = 'scratch operand']
  #allocation3 [shape = 'f32[8,1]{1,0:T(8,128)}', space=vmem, size = 0x1000, scoped, tag = 'scratch operand']
  #allocation4 [shape = 'f32[8,1]{1,0:T(8,128)}', space=vmem, size = 0x1000, scoped, tag = 'scratch operand']
  #allocation5 [shape = 'bf16[8,128]{1,0:T(8,128)(2,1)}', space=vmem, size = 0x800, scoped, tag = 'scratch operand']
  %s0 = inlined_call_operand.vmem [shape: s32[16,1], index: 0, kind: input, shape index: {}]
  %s1 = inlined_call_operand.vmem [shape: f32[16,128], index: 1, kind: input, shape index: {}]
  %s2 = inlined_call_operand.hbm [shape: bf16[128,384], index: 2, kind: input, shape index: {}]
  %s3 = inlined_call_operand.hbm [shape: f32[2,1,128], index: 3, kind: output, shape index: {}]
  %s4 = sld [smem:[#allocation0]]
  $region57: #{tpu_custom_call.1} parent=0
    _
  %s6 = ssub.s32 1, %s4
  %s7 = scalar_select 0, %s6, %s4
  $region1: #{tpu_custom_call.1} parent=0
    #allocation6 [shape = 'u8[65536]{0}', space=vmem, size = 0x10000, scoped, tag = 'input window, operand 2']
    #allocation7 [shape = 's32[2]{0}', space=sflag, size = 0x8, scoped, tag = 'scoped memory for tpu_custom_call.1']
    #allocation8 [shape = 's32[2]{0}', space=sflag, size = 0x8, scoped, tag = 'scoped memory for tpu_custom_call.1']
    #allocation9 [shape = 'u8[1024]{0}', space=vmem, size = 0x400, scoped, tag = 'output window, operand 0']
    %8 = vsyncpa [#allocation7], 0
    %s9 = scalar_lea.sflag [#allocation7], 1
    %10 = vsyncpa %s9, 0
    %11 = vsyncpa [#allocation8], 0
    %s12 = scalar_lea.sflag [#allocation8], 1
    %13 = vsyncpa %s12, 0
    loop: start=0, step=1, limit=8
    $region2: #{tpu_custom_call.1} parent=1 // loop_pre_header
      _
    $region3: #{tpu_custom_call.1} parent=1 // loop_header
      %s15 = sphi 0, %s19
      %p16 = scmp.ge.s32.totalorder %s15, 8
      %s22 = sphi 0, %s34
      %s23 = sphi 0, %s30
      %s24 = sphi 0, %s22
      %s25 = sphi 0, %s23
      %s26 = sphi 0, %s24
      %s27 = sphi 0, %s25
      %s37 = sphi 0, %s39
      %s40 = sphi 0, %s37
      %s41 = sphi 0, %s40
      %s57 = sphi 0, %s41
      %s63 = sphi 0, %s65
      %s66 = sphi 0, %s63
      %s67 = sphi 0, %s66
      %s83 = sphi 0, %s67
      %s89 = sphi 0, %s91
      %s92 = sphi 0, %s89
      %s93 = sphi 0, %s92
      %s109 = sphi 0, %s93
      %s115 = sphi 0, %s117
      %s118 = sphi 0, %s115
      %s119 = sphi 0, %s118
      %s135 = sphi 0, %s119
    $region4: #{tpu_custom_call.1} parent=1 // loop_header_branch
      %18 = sbr.rel (%p16) target = $region8
    $region5: #{tpu_custom_call.1} parent=1 // loop_body
      %s20 = ssub.s32 %s15, 1
      %s21 = ssub.s32 %s15, 2
      %s28 = sadd.s32 1, %s23
      %p29 = scmp.ge.s32.totalorder %s28, 3
      %s30 = scalar_select %p29, 0, %s28
      %s31 = sadd.s32 1, %s22
      %s32 = scalar_select %p29, %s31, %s22
      %p33 = scmp.ge.s32.totalorder %s32, 2
      %s34 = scalar_select %p33, 0, %s32
      %s35 = ssub.s32 %s22, %s34
      %p36 = scmp.eq.s32.totalorder %s35, 0
      %s38 = sadd.s32 %s37, 1
      %s39 = scalar_select %p36, %s37, %s38
      %p42 = pneg %p36
      %p43 = scmp.eq.s32.totalorder %s15, 5
      %p44 = por %p42, %p43
      %p45 = scmp.ne.s32.totalorder %s37, %s40
      %p46 = scmp.eq.s32.totalorder %s15, 0
      %p47 = por %p45, %p46
      %p48 = scmp.ne.s32.totalorder %s37, %s40
      %p49 = scmp.eq.s32.totalorder %s20, 5
      %p50 = por %p48, %p49
      %p51 = scmp.ne.s32.totalorder %s40, %s41
      %p52 = scmp.eq.s32.totalorder %s20, 0
      %p53 = por %p51, %p52
      %p54 = scmp.ne.s32.totalorder %s40, %s41
      %p55 = scmp.eq.s32.totalorder %s21, 5
      %p56 = por %p54, %p55
      %p58 = scmp.ne.s32.totalorder %s41, %s57
      %p59 = scmp.eq.s32.totalorder %s21, 0
      %p60 = por %p58, %p59
      %s61 = ssub.s32 %s22, %s34
      %p62 = scmp.eq.s32.totalorder %s61, 0
      %s64 = sadd.s32 %s63, 1
      %s65 = scalar_select %p62, %s63, %s64
      %p68 = pneg %p62
      %p69 = scmp.eq.s32.totalorder %s15, 5
      %p70 = por %p68, %p69
      %p71 = scmp.ne.s32.totalorder %s63, %s66
      %p72 = scmp.eq.s32.totalorder %s15, 0
      %p73 = por %p71, %p72
      %p74 = scmp.ne.s32.totalorder %s63, %s66
      %p75 = scmp.eq.s32.totalorder %s20, 5
      %p76 = por %p74, %p75
      %p77 = scmp.ne.s32.totalorder %s66, %s67
      %p78 = scmp.eq.s32.totalorder %s20, 0
      %p79 = por %p77, %p78
      %p80 = scmp.ne.s32.totalorder %s66, %s67
      %p81 = scmp.eq.s32.totalorder %s21, 5
      %p82 = por %p80, %p81
      %p84 = scmp.ne.s32.totalorder %s67, %s83
      %p85 = scmp.eq.s32.totalorder %s21, 0
      %p86 = por %p84, %p85
      %s87 = ssub.s32 %s23, %s30
      %p88 = scmp.eq.s32.totalorder %s87, 0
      %s90 = sadd.s32 %s89, 1
      %s91 = scalar_select %p88, %s89, %s90
      %p94 = pneg %p88
      %p95 = scmp.eq.s32.totalorder %s15, 5
      %p96 = por %p94, %p95
      %p97 = scmp.ne.s32.totalorder %s89, %s92
      %p98 = scmp.eq.s32.totalorder %s15, 0
      %p99 = por %p97, %p98
      %p100 = scmp.ne.s32.totalorder %s89, %s92
      %p101 = scmp.eq.s32.totalorder %s20, 5
      %p102 = por %p100, %p101
      %p103 = scmp.ne.s32.totalorder %s92, %s93
      %p104 = scmp.eq.s32.totalorder %s20, 0
      %p105 = por %p103, %p104
      %p106 = scmp.ne.s32.totalorder %s92, %s93
      %p107 = scmp.eq.s32.totalorder %s21, 5
      %p108 = por %p106, %p107
      %p110 = scmp.ne.s32.totalorder %s93, %s109
      %p111 = scmp.eq.s32.totalorder %s21, 0
      %p112 = por %p110, %p111
      %s113 = ssub.s32 %s22, %s34
      %p114 = scmp.eq.s32.totalorder %s113, 0
      %s116 = sadd.s32 %s115, 1
      %s117 = scalar_select %p114, %s115, %s116
      %p120 = pneg %p114
      %p121 = scmp.eq.s32.totalorder %s15, 5
      %p122 = por %p120, %p121
      %p123 = scmp.ne.s32.totalorder %s115, %s118
      %p124 = scmp.eq.s32.totalorder %s15, 0
      %p125 = por %p123, %p124
      %p126 = scmp.ne.s32.totalorder %s115, %s118
      %p127 = scmp.eq.s32.totalorder %s20, 5
      %p128 = por %p126, %p127
      %p129 = scmp.ne.s32.totalorder %s118, %s119
      %p130 = scmp.eq.s32.totalorder %s20, 0
      %p131 = por %p129, %p130
      %p132 = scmp.ne.s32.totalorder %s118, %s119
      %p133 = scmp.eq.s32.totalorder %s21, 5
      %p134 = por %p132, %p133
      %p136 = scmp.ne.s32.totalorder %s119, %s135
      %p137 = scmp.eq.s32.totalorder %s21, 0
      %p138 = por %p136, %p137
      %p139 = scmp.le.s32.totalorder 1, %s15
      %p140 = scmp.lt.s32.totalorder %s15, 7
      %p141 = pnand %p139, %p140
      %p142 = pneg %p141
      // Predicated region
      $region9: #{tpu_custom_call.1} parent=5 // pred_check
        _
      $region10: #{tpu_custom_call.1} parent=5 // pred_check_branch
        %144 = sbr.rel (%p141) target = $region12
      $region11: #{tpu_custom_call.1} parent=5 // pred_region
        %s145 = ssub.s32 %s15, 1
      $region12: #{tpu_custom_call.1} parent=5 // pred_fallthru
        _
      %p146 = scmp.lt.s32.totalorder %s15, 6
      // Predicated region
      $region13: #{tpu_custom_call.1} parent=5 // pred_check
        %p147 = pneg %p146
      $region14: #{tpu_custom_call.1} parent=5 // pred_check_branch
        %149 = sbr.rel (%p147) target = $region16
      $region15: #{tpu_custom_call.1} parent=5 // pred_region
        // Predicated region
        $region17: #{tpu_custom_call.1} parent=15 // pred_check
          %p150 = pneg %p47
        $region18: #{tpu_custom_call.1} parent=15 // pred_check_branch
          %152 = sbr.rel (%p150) target = $region20
        $region19: #{tpu_custom_call.1} parent=15 // pred_region
          %p153 = scmp.lt.s32.totalorder %s22, 1
          %s154 = scalar_select %p153, %s22, 1
          %s155 = smul.addr %s154, 8
          %s156 = scalar_lea.vmem %s0, %s155
        $region20: #{tpu_custom_call.1} parent=15 // pred_fallthru
          _
        // Predicated region
        $region21: #{tpu_custom_call.1} parent=15 // pred_check
          %p157 = pneg %p73
        $region22: #{tpu_custom_call.1} parent=15 // pred_check_branch
          %159 = sbr.rel (%p157) target = $region24
        $region23: #{tpu_custom_call.1} parent=15 // pred_region
          %p160 = scmp.lt.s32.totalorder %s22, 1
          %s161 = scalar_select %p160, %s22, 1
          %s162 = smul.addr %s161, 8
          %s163 = scalar_lea.vmem %s1, %s162
        $region24: #{tpu_custom_call.1} parent=15 // pred_fallthru
          _
        // Predicated region
        $region25: #{tpu_custom_call.1} parent=15 // pred_check
          %p164 = pneg %p99
        $region26: #{tpu_custom_call.1} parent=15 // pred_check_branch
          %166 = sbr.rel (%p164) target = $region28
        $region27: #{tpu_custom_call.1} parent=15 // pred_region
          %s167 = sand.u32 %s89, 1
          %s168 = scalar_lea.sflag [#allocation7], %s167
          %s169 = sand.u32 %s89, 1
          %s170 = smul.addr %s169, 64
          %s171 = scalar_lea.vmem [#allocation6], %s170
          %s173 = ssub.s32 1024, 1024
          %174 = vsyncadd %s168, %s173
          %s175 = smul.addr %s23, 64
          %s176 = scalar_lea.hbm %s2, %s175
          %s177 = sshll.u32 %s171, 4
          %s178 = int_to_ptr.vmem [resolvable:$true] %s177
          %183 = dma.hbm_to_vmem [thread:$0]  %s176, 1024, %s178, %s168, 192, 64, 4
        $region28: #{tpu_custom_call.1} parent=15 // pred_fallthru
          _
      $region16: #{tpu_custom_call.1} parent=5 // pred_fallthru
        _
      %p184 = scmp.le.s32.totalorder 1, %s15
      %p185 = scmp.lt.s32.totalorder %s15, 7
      %p186 = pnand %p184, %p185
      %p187 = pneg %p186
      // Predicated region
      $region29: #{tpu_custom_call.1} parent=5 // pred_check
        _
      $region30: #{tpu_custom_call.1} parent=5 // pred_check_branch
        %189 = sbr.rel (%p186) target = $region32
      $region31: #{tpu_custom_call.1} parent=5 // pred_region
        %s190 = ssub.s32 %s15, 1
        %s191 = sand.u32 %s92, 1
        %s192 = scalar_lea.sflag [#allocation7], %s191
        %s193 = sand.u32 %s92, 1
        %s194 = smul.addr %s193, 64
        %s195 = scalar_lea.vmem [#allocation6], %s194
        // Predicated region
        $region33: #{tpu_custom_call.1} parent=31 // pred_check
          %p196 = pneg %p105
        $region34: #{tpu_custom_call.1} parent=31 // pred_check_branch
          %198 = sbr.rel (%p196) target = $region36
        $region35: #{tpu_custom_call.1} parent=31 // pred_region
          %199 = dma.done %s192, 1024
        $region36: #{tpu_custom_call.1} parent=31 // pred_fallthru
          _
        %p200 = scmp.lt.s32.totalorder %s24, 1
        %s201 = scalar_select %p200, %s24, 1
        %s202 = smul.addr %s201, 8
        %s203 = scalar_lea.vmem %s0, %s202
        %p204 = pneg %p53
        %p205 = pneg %p50
        %p206 = scmp.lt.s32.totalorder %s24, 1
        %s207 = scalar_select %p206, %s24, 1
        %s208 = smul.addr %s207, 8
        %s209 = scalar_lea.vmem %s1, %s208
        %p210 = pneg %p79
        %p211 = pneg %p76
        %s212 = sand.u32 %s92, 1
        %s213 = scalar_lea.sflag [#allocation7], %s212
        %s214 = sand.u32 %s92, 1
        %s215 = smul.addr %s214, 64
        %s216 = scalar_lea.vmem [#allocation6], %s215
        %p217 = pneg %p105
        %p218 = pneg %p102
        %p219 = pneg %p131
        %p220 = pneg %p128
        %s221 = sand.u32 %s118, 1
        %s222 = scalar_lea.sflag [#allocation8], %s221
        %s223 = sand.u32 %s118, 1
        %s224 = scalar_lea.vmem [#allocation9], %s223
        %p225 = scmp.lt.s32.totalorder %s24, 1
        %s226 = scalar_select %p225, %s24, 1
        %s227 = smul.addr %s226, 8
        %s228 = scalar_lea.vmem %s0, %s227
        %p229 = scmp.lt.s32.totalorder %s24, 1
        %s230 = scalar_select %p229, %s24, 1
        %s231 = smul.addr %s230, 8
        %s232 = scalar_lea.vmem %s1, %s231
        %v234 = vld [vmem:[%s228] sm:$0xff]
        %p235 = scmp.eq.s32.totalorder %s25, 0
        // Predicated region
        $region37: #{tpu_custom_call.1} parent=31 // pred_check
          %p236 = pneg %p235
        $region38: #{tpu_custom_call.1} parent=31 // pred_check_branch
          %238 = sbr.rel (%p236) target = $region40
        $region39: #{tpu_custom_call.1} parent=31 // pred_region
          %vm239 = vcmask 7168
          %240 = vst.msk [vmem:[#allocation2] sm:$0xff] %vm239, -1e+30
          %241 = vst.msk [vmem:[#allocation3] sm:$0xff] %vm239, 0.0
          %242 = vst.msk [vmem:[#allocation4] sm:$0xff] %vm239, 0.0
          %v243 = vld [vmem:[%s232] sm:$0xff]
          %v244 = vmul.f32 %v243, %v243
          %245 = vadd.xlane.f32.xlu0 %v244
          %v246 = vpop.xlane.xlu0 %245
          %v247 = vmax.f32 %v246, 1e-24
          %v248 = vrsqrt.pop %v247
          %v249 = vmul.f32 %v243, %v248
          %v250 = vpack.c.bf16 %v249, %v249
          %251 = vst [vmem:[#allocation5] sm:$0xf] %v250
        $region40: #{tpu_custom_call.1} parent=31 // pred_fallthru
          _
        %v252 = vld [vmem:[%s195] sm:$0xf]
        %v253 = vld [vmem:[%s195 + $0x4] sm:$0xf]
        %v254 = vld [vmem:[%s195 + $0x8] sm:$0xf]
        %v255 = vld [vmem:[%s195 + $0xc] sm:$0xf]
        %v256 = vld [vmem:[%s195 + $0x10] sm:$0xf]
        %v257 = vld [vmem:[%s195 + $0x14] sm:$0xf]
        %v258 = vld [vmem:[%s195 + $0x18] sm:$0xf]
        %v259 = vld [vmem:[%s195 + $0x1c] sm:$0xf]
        %v260 = vld [vmem:[%s195 + $0x20] sm:$0xf]
        %v261 = vld [vmem:[%s195 + $0x24] sm:$0xf]
        %v262 = vld [vmem:[%s195 + $0x28] sm:$0xf]
        %v263 = vld [vmem:[%s195 + $0x2c] sm:$0xf]
        %v264 = vld [vmem:[%s195 + $0x30] sm:$0xf]
        %v265 = vld [vmem:[%s195 + $0x34] sm:$0xf]
        %v266 = vld [vmem:[%s195 + $0x38] sm:$0xf]
        %v267 = vld [vmem:[%s195 + $0x3c] sm:$0xf]
        %v268 = vld [vmem:[#allocation5] sm:$0xf]
        %v285 = vunpack.c.l.b16 %v252
        %v286 = vunpack.c.l.b16 %v253
        %v287 = vunpack.c.l.b16 %v254
        %v288 = vunpack.c.l.b16 %v255
        %v289 = vunpack.c.l.b16 %v256
        %v290 = vunpack.c.l.b16 %v257
        %v291 = vunpack.c.l.b16 %v258
        %v292 = vunpack.c.l.b16 %v259
        %v293 = vunpack.c.l.b16 %v260
        %v294 = vunpack.c.l.b16 %v261
        %v295 = vunpack.c.l.b16 %v262
        %v296 = vunpack.c.l.b16 %v263
        %v297 = vunpack.c.l.b16 %v264
        %v298 = vunpack.c.l.b16 %v265
        %v299 = vunpack.c.l.b16 %v266
        %v300 = vunpack.c.l.b16 %v267
        %v301 = vpack.c.b16 %v286, %v285
        %v302 = vpack.c.b16 %v288, %v287
        %v303 = vpack.c.b16 %v290, %v289
        %v304 = vpack.c.b16 %v292, %v291
        %v305 = vpack.c.b16 %v294, %v293
        %v306 = vpack.c.b16 %v296, %v295
        %v307 = vpack.c.b16 %v298, %v297
        %v308 = vpack.c.b16 %v300, %v299
        %317 = vmatprep.subr.bf16.mxu0 0
        %318 = vmatpush1.bf16.msra.mxu0 %v301
        %319 = vmatprep.subr.bf16.mxu0 0
        %320 = vmatpush1.bf16.msra.mxu0 %v302
        %321 = vmatprep.subr.bf16.mxu0 0
        %322 = vmatpush1.bf16.msra.mxu0 %v303
        %323 = vmatprep.subr.bf16.mxu0 0
        %324 = vmatpush1.bf16.msra.mxu0 %v304
        %325 = vmatprep.subr.bf16.mxu0 0
        %326 = vmatpush1.bf16.msra.mxu0 %v305
        %327 = vmatprep.subr.bf16.mxu0 0
        %328 = vmatpush1.bf16.msra.mxu0 %v306
        %329 = vmatprep.subr.bf16.mxu0 0
        %330 = vmatpush1.bf16.msra.mxu0 %v307
        %331 = vmatprep.subr.bf16.mxu0 0
        %332 = vmatpush1.bf16.msra.mxu0 %v308
        %333 = vmatprep.subr.bf16.mxu0 0
        %334 = vmatpush1.bf16.msra.mxu0 0
        %335 = vmatprep.subr.bf16.mxu0 0
        %336 = vmatpush1.bf16.msra.mxu0 0
        %337 = vmatprep.subr.bf16.mxu0 0
        %338 = vmatpush1.bf16.msra.mxu0 0
        %339 = vmatprep.subr.bf16.mxu0 0
        %340 = vmatpush1.bf16.msra.mxu0 0
        %341 = vmatprep.subr.bf16.mxu0 0
        %342 = vmatpush1.bf16.msra.mxu0 0
        %343 = vmatprep.subr.bf16.mxu0 0
        %344 = vmatpush1.bf16.msra.mxu0 0
        %345 = vmatprep.subr.bf16.mxu0 0
        %346 = vmatpush1.bf16.msra.mxu0 0
        %347 = vmatprep.subr.bf16.mxu0 0
        %348 = vmatpush1.bf16.msra.mxu0 0
        %349 = vmatprep.mubr.bf16.mxu0 0
        %350 = vmatmul.mubr.bf16.gmra.mrb[0].mxu0 %v268
        %v351 = vpop.f32.mrb[0].mxu0
        %v352 = vadd.f32 0.0, %v351
        %v353 = vpop.f32.mrb[0].mxu0
        %v354 = vpop.f32.mrb[0].mxu0
        %v355 = vpop.f32.mrb[0].mxu0
        %356 = vdwg.mxu0
        %v357 = vunpack.c.l.bf16 %v252
        %v358 = vunpack.c.l.bf16 %v253
        %v359 = vunpack.c.l.bf16 %v254
        %v360 = vunpack.c.l.bf16 %v255
        %v361 = vunpack.c.l.bf16 %v256
        %v362 = vunpack.c.l.bf16 %v257
        %v363 = vunpack.c.l.bf16 %v258
        %v364 = vunpack.c.l.bf16 %v259
        %v365 = vunpack.c.l.bf16 %v260
        %v366 = vunpack.c.l.bf16 %v261
        %v367 = vunpack.c.l.bf16 %v262
        %v368 = vunpack.c.l.bf16 %v263
        %v369 = vunpack.c.l.bf16 %v264
        %v370 = vunpack.c.l.bf16 %v265
        %v371 = vunpack.c.l.bf16 %v266
        %v372 = vunpack.c.l.bf16 %v267
        %v373 = vmul.f32 %v357, %v357
        %v374 = vmul.f32 %v358, %v358
        %v375 = vmul.f32 %v359, %v359
        %v376 = vmul.f32 %v360, %v360
        %v377 = vmul.f32 %v361, %v361
        %v378 = vmul.f32 %v362, %v362
        %v379 = vmul.f32 %v363, %v363
        %v380 = vmul.f32 %v364, %v364
        %v381 = vmul.f32 %v365, %v365
        %v382 = vmul.f32 %v366, %v366
        %v383 = vmul.f32 %v367, %v367
        %v384 = vmul.f32 %v368, %v368
        %v385 = vmul.f32 %v369, %v369
        %v386 = vmul.f32 %v370, %v370
        %v387 = vmul.f32 %v371, %v371
        %v388 = vmul.f32 %v372, %v372
        %v389 = vadd.f32 %v373, %v374
        %v390 = vadd.f32 %v389, %v375
        %v391 = vadd.f32 %v390, %v376
        %v392 = vadd.f32 %v391, %v377
        %v393 = vadd.f32 %v392, %v378
        %v394 = vadd.f32 %v393, %v379
        %v395 = vadd.f32 %v394, %v380
        %v396 = vadd.f32 %v395, %v381
        %v397 = vadd.f32 %v396, %v382
        %v398 = vadd.f32 %v397, %v383
        %v399 = vadd.f32 %v398, %v384
        %v400 = vadd.f32 %v399, %v385
        %v401 = vadd.f32 %v400, %v386
        %v402 = vadd.f32 %v401, %v387
        %v403 = vadd.f32 %v402, %v388
        %v404 = vrot.slane %v403, 4
        %v405 = vadd.f32 %v403, %v404
        %v406 = vrot.slane %v405, 2
        %v407 = vadd.f32 %v405, %v406
        %v408 = vrot.slane %v407, 1
        %v409 = vadd.f32 %v407, %v408
        %v410 = vmax.f32 %v409, 1e-24
        %v411 = vrsqrt.pop %v410
        %v412 = vmul.f32 %v352, %v411
        %v413 = vmax.f32 %v412, -1.0
        %v414 = vmin.f32 %v413, 1.0
        %s415 = smul.u32 %s25, 128
        %v416 = vlaneseq
        %v417 = vand.u32 %v416, 127
        %v418 = vstv %s415
        %v419 = vadd.s32 %v418, %v417
        %420 = vset.pattern.permute.xlu0 0
        %421 = vperm.xlu0 %420, %v234
        %v422 = vpop.permute.xlu0 %421
        %vm423 = vcmp.eq.s32.totalorder %v419, %v422
        %vm424 = vcmp.ge.s32.totalorder %v234, %v418
        %s425 = sadd.s32 %s415, 128
        %v426 = vstv %s425
        %vm427 = vcmp.lt.s32.totalorder %v234, %v426
        %vm428 = vmand %vm424, %vm427
        %v429 = vsel %vm423, %v414, 0.0
        %430 = vadd.xlane.f32.xlu0 %v429
        %v431 = vpop.xlane.xlu0 %430
        %v432 = vmul.f32 %v431, %v431
        %v433 = vsub.f32 1.0, %v432
        %v434 = vmax.f32 %v433, 0.0
        %v435 = vrsqrt.pop %v434
        %v436 = vmul.f32 %v434, %v435
        %vm437 = vcmp.eq.f32.partialorder %v434, inf
        %v438 = vsel %vm437, %v434, %v436
        %vm439 = vcmp.eq.f32.partialorder %v434, 0.0
        %v440 = vand.u32 %v434, 2147483648
        %v441 = vsel %vm439, %v440, %v438
        %v442 = vmul.f32 %v431, 0.87758255
        %v443 = vmul.f32 %v441, 0.47942555
        %v444 = vsub.f32 %v442, %v443
        %v445 = vsel %vm423, %v444, %v414
        %v446 = vmul.f32 %v445, 64.0
        %vm447 = vcmp.lt.s32.totalorder %v419, 300
        %v448 = vsel %vm447, 1, 0
        %vm449 = vcmp.eq.s32.totalorder %v448, 1
        %v450 = vsel %vm449, %v446, -1e+30
        %v451 = vld [vmem:[#allocation2] sm:$0xff]
        %452 = vmax.xlane.f32.xlu0 %v450
        %v453 = vpop.xlane.xlu0 %452
        %v454 = vmax.f32 %v451, %v453
        %456 = vset.pattern.permute.xlu0 0
        %457 = vperm.xlu0 %456, %v454
        %v458 = vpop.permute.xlu0 %457
        %v460 = vsub.f32 %v450, %v458
        %v461 = vmul.f32 %v460, 1.442695
        %v462 = vpow.pop %v461
        %v463 = vsub.f32 %v451, %v454
        %v464 = vmul.f32 %v463, 1.442695
        %v465 = vpow.pop %v464
        %v466 = vld [vmem:[#allocation3] sm:$0xff]
        %v467 = vmul.f32 %v465, %v466
        %468 = vadd.xlane.f32.xlu0 %v462
        %v469 = vpop.xlane.xlu0 %468
        %v470 = vadd.f32 %v467, %v469
        %vm471 = vcmask 7168
        %472 = vst.msk [vmem:[#allocation3] sm:$0xff] %vm471, %v470
        %v473 = vld [vmem:[#allocation4] sm:$0xff]
        %v474 = vmul.f32 %v444, 64.0
        %v475 = vsel %vm428, %v474, 0.0
        %v476 = vadd.f32 %v473, %v475
        %477 = vst.msk [vmem:[#allocation4] sm:$0xff] %vm471, %v476
        %478 = vst.msk [vmem:[#allocation2] sm:$0xff] %vm471, %v454
        %p479 = scmp.eq.s32.totalorder %s25, 2
        // Predicated region
        $region41: #{tpu_custom_call.1} parent=31 // pred_check
          %p480 = pneg %p479
        $region42: #{tpu_custom_call.1} parent=31 // pred_check_branch
          %482 = sbr.rel (%p480) target = $region44
        $region43: #{tpu_custom_call.1} parent=31 // pred_region
          %v483 = vld [vmem:[#allocation2] sm:$0xff]
          %v484 = vld [vmem:[#allocation3] sm:$0xff]
          %v485 = vlog2.pop %v484
          %v486 = vmul.f32 %v485, 0.6931472
          %v487 = vadd.f32 %v483, %v486
          %vm488 = vcmp.ge.s32.totalorder %v234, 0
          %v489 = vld [vmem:[#allocation4] sm:$0xff]
          %v490 = vsub.f32 %v489, %v487
          %v491 = vsel %vm488, %v490, -69.07755
          %v492 = vmax.f32 %v491, -69.07755
          %v493 = vsub.f32 0.0, %v492
          %s494 = smul.u32 %s24, 8
          %v495 = vlaneseq
          %v496 = vshrl.u32 %v495, 7
          %v497 = vstv %s494
          %v498 = vadd.s32 %v497, %v496
          %vm499 = vcmp.lt.s32.totalorder %v498, 12
          %v500 = vsel %vm499, %v493, 0.0
          %v501 = vsel %vm471, %v500, 0.0
          %v502 = vrot.slane %v501, 4
          %v503 = vadd.f32 %v501, %v502
          %v504 = vrot.slane %v503, 2
          %v505 = vadd.f32 %v503, %v504
          %v506 = vrot.slane %v505, 1
          %v507 = vadd.f32 %v505, %v506
          %509 = vset.pattern.permute.xlu0 0
          %510 = vperm.xlu0 %509, %v507
          %v511 = vpop.permute.xlu0 %510
          %513 = vst [vmem:[%s224] sm:$0x1] %v511
        $region44: #{tpu_custom_call.1} parent=31 // pred_fallthru
          _
        %s514 = sand.u32 %s118, 1
        %s515 = scalar_lea.sflag [#allocation8], %s514
        %s516 = sand.u32 %s118, 1
        %s517 = scalar_lea.vmem [#allocation9], %s516
        // Predicated region
        $region45: #{tpu_custom_call.1} parent=31 // pred_check
          %p518 = pneg %p128
        $region46: #{tpu_custom_call.1} parent=31 // pred_check_branch
          %520 = sbr.rel (%p518) target = $region48
        $region47: #{tpu_custom_call.1} parent=31 // pred_region
          %s522 = ssub.s32 16, 16
          %523 = vsyncadd %s515, %s522
          %s524 = smul.addr %s24, 16
          %s525 = scalar_lea.hbm %s3, %s524
          %s527 = sshll.u32 %s517, 4
          %s528 = int_to_ptr.vmem [resolvable:$true] %s527
          %530 = dma.vmem_to_hbm [thread:$0]  %s528, 16, %s525, %s515
        $region48: #{tpu_custom_call.1} parent=31 // pred_fallthru
          _
      $region32: #{tpu_custom_call.1} parent=5 // pred_fallthru
        _
      %p531 = scmp.le.s32.totalorder 2, %s15
      // Predicated region
      $region49: #{tpu_custom_call.1} parent=5 // pred_check
        %p532 = pneg %p531
      $region50: #{tpu_custom_call.1} parent=5 // pred_check_branch
        %534 = sbr.rel (%p532) target = $region52
      $region51: #{tpu_custom_call.1} parent=5 // pred_region
        %s535 = ssub.s32 %s15, 2
        // Predicated region
        $region53: #{tpu_custom_call.1} parent=51 // pred_check
          %p536 = pneg %p134
        $region54: #{tpu_custom_call.1} parent=51 // pred_check_branch
          %538 = sbr.rel (%p536) target = $region56
        $region55: #{tpu_custom_call.1} parent=51 // pred_region
          %s539 = sand.u32 %s119, 1
          %s540 = scalar_lea.sflag [#allocation8], %s539
          %s541 = sand.u32 %s119, 1
          %s542 = scalar_lea.vmem [#allocation9], %s541
          %543 = dma.done %s540, 16
        $region56: #{tpu_custom_call.1} parent=51 // pred_fallthru
          _
      $region52: #{tpu_custom_call.1} parent=5 // pred_fallthru
        _
    $region6: #{tpu_custom_call.1} parent=1 // loop_footer
      %s19 = sadd.s32 1, %s15
    $region7: #{tpu_custom_call.1} parent=1 // loop_footer_branch
      %14 = sbr.rel target = $region3
    $region8: #{tpu_custom_call.1} parent=1 // loop_exit
      _
    %544 = vsyncpa [#allocation7], 1
    %s545 = scalar_lea.sflag [#allocation7], 1
    %546 = vsyncpa %s545, 1
    %547 = vsyncpa [#allocation8], 1
    %s548 = scalar_lea.sflag [#allocation8], 1
    %549 = vsyncpa %s548, 1

</llo_original>
